<compile_context>
chip_gen: v5e
topology: v5e:2x2
jax: 0.10.0
libtpu: 0.0.40
codegen_flags: <defaults>
</compile_context>

<pallas_src>
import jax
import jax.numpy as jnp
from jax.experimental import pallas as pl
from jax.experimental.pallas import tpu as pltpu


def _round_up(n, m):
    return ((n + m - 1) // m) * m


def _mlp_kernel(x_ref, w1_ref, b1_ref, w2_ref, b2_ref, w3_ref, b3_ref, o_ref):
    cdt = w2_ref.dtype                              # MXU compute dtype
    x = x_ref[...].astype(jnp.float32)              # [4, Bt]

    # Linear(4, 16) + ReLU on the VPU: 4 broadcast multiply-adds (K=4 wastes the MXU).
    w1 = w1_ref[...]                                # [16, 4] f32
    h1 = b1_ref[...] + w1[:, 0:1] * x[0:1, :]       # [16, Bt]
    for k in range(1, 4):
        h1 = h1 + w1[:, k:k + 1] * x[k:k + 1, :]
    h1 = jnp.maximum(h1, 0.0)

    # Linear(16, 8) + ReLU on the MXU (f32 accumulation).
    h2 = jnp.dot(w2_ref[...], h1.astype(cdt),
                 preferred_element_type=jnp.float32) + b2_ref[...]
    h2 = jnp.maximum(h2, 0.0)                       # [8, Bt]

    # Linear(8, 1) + Sigmoid: lane-broadcast w3 column, sublane reduce on the XLU.
    z = jnp.sum(w3_ref[...] * h2, axis=0, keepdims=True) + b3_ref[...]   # [1, Bt]
    o_ref[...] = jax.nn.sigmoid(z)                  # sigmoid's exp runs on the EUP slot


def ckd_forward(x, params, *, compute_dtype=jnp.bfloat16, block_b=32768):
    """x: [B, 4] float32. params: weights stored (in, out), biases (1, out), all f32.

    Returns [B, 1] float32 probabilities.
    """
    B = x.shape[0]

    # Batch tile: multiple of 128 lanes; pad B so the grid divides evenly.
    bt = min(block_b, _round_up(B, 128))
    bp = _round_up(B, bt)
    grid = (pl.cdiv(bp, bt),)

    # Wrapper-side layout plumbing: cast first (half the bytes), then transpose + pad.
    x_t = x.astype(compute_dtype).T                 # [4, B]
    x_t = jnp.pad(x_t, ((0, 0), (0, bp - B)))       # [4, Bp]

    # Weights in (out, in) form; biases as columns.  VPU/XLU layers stay f32.
    w1 = params["w1"].T.astype(jnp.float32)         # [16, 4]
    b1 = params["b1"].T.astype(jnp.float32)         # [16, 1]
    w2 = params["w2"].T.astype(compute_dtype)       # [8, 16]  (MXU layer)
    b2 = params["b2"].T.astype(jnp.float32)         # [8, 1]
    w3 = params["w3"].astype(jnp.float32)           # [8, 1]   (column for sublane reduce)
    b3 = params["b3"].astype(jnp.float32)           # [1, 1]

    out_t = pl.pallas_call(
        _mlp_kernel,
        out_shape=jax.ShapeDtypeStruct((1, bp), jnp.float32),
        grid=grid,
        in_specs=[
            pl.BlockSpec((4, bt), lambda i: (0, i)),      # x tile (batch on lanes)
            pl.BlockSpec((16, 4), lambda i: (0, 0)),      # w1 (VMEM-resident)
            pl.BlockSpec((16, 1), lambda i: (0, 0)),      # b1
            pl.BlockSpec((8, 16), lambda i: (0, 0)),      # w2
            pl.BlockSpec((8, 1), lambda i: (0, 0)),       # b2
            pl.BlockSpec((8, 1), lambda i: (0, 0)),       # w3 column
            pl.BlockSpec((1, 1), lambda i: (0, 0)),       # b3
        ],
        out_specs=pl.BlockSpec((1, bt), lambda i: (0, i)),  # lane-dense output tile
        compiler_params=pltpu.CompilerParams(
            dimension_semantics=("parallel",),            # shard batch across TCs on v7x
            vmem_limit_bytes=32 * 1024 * 1024,            # covers padded tiles on all gens
        ),
    )(x_t, w1, b1, w2, b2, w3, b3)

    return out_t[:, :B].reshape(B, 1)                     # row -> [B, 1], no transpose


def init_params(key):
    """Deterministic init matching the PyTorch layer shapes (stored as (in, out))."""
    ks = jax.random.split(key, 6)

    def uniform(k, shape, fan_in):
        bound = 1.0 / jnp.sqrt(jnp.float32(fan_in))
        return jax.random.uniform(k, shape, jnp.float32, -bound, bound)

    return {
        "w1": uniform(ks[0], (4, 16), 4),   # Linear(4, 16).weight^T
        "b1": uniform(ks[1], (1, 16), 4),   # Linear(4, 16).bias
        "w2": uniform(ks[2], (16, 8), 16),  # Linear(16, 8).weight^T
        "b2": uniform(ks[3], (1, 8), 16),   # Linear(16, 8).bias
        "w3": uniform(ks[4], (8, 1), 8),    # Linear(8, 1).weight^T
        "b3": uniform(ks[5], (1, 1), 8),    # Linear(8, 1).bias
    }


def ckd_forward_ref(x, p):
    h1 = jnp.maximum(x @ p["w1"] + p["b1"], 0.0)
    h2 = jnp.maximum(h1 @ p["w2"] + p["b2"], 0.0)
    return jax.nn.sigmoid(h2 @ p["w3"] + p["b3"])


if __name__ == "__main__":
    key = jax.random.PRNGKey(0)
    k_x, k_p = jax.random.split(key)

    B = 8
    x = jax.random.normal(k_x, (B, 4), jnp.float32)
    params = init_params(k_p)

    ref = ckd_forward_ref(x, params)

    # f32 matmul-input path.  The single remaining MXU dot may still decompose into
    # bf16 passes at default precision, so keep a moderate (not 1e-5) tolerance.
    out_f32 = jax.block_until_ready(
        ckd_forward(x, params, compute_dtype=jnp.float32))
    assert out_f32.shape == (B, 1), out_f32.shape
    assert jnp.allclose(out_f32, ref, atol=2e-3, rtol=2e-3), (out_f32, ref)

    # Default fast path (bf16 MXU inputs, f32 accumulation / elementwise).
    out_bf16 = jax.block_until_ready(ckd_forward(x, params))
    assert out_bf16.shape == (B, 1), out_bf16.shape
    assert jnp.allclose(out_bf16, ref, atol=2e-2, rtol=2e-2), (out_bf16, ref)

    print("KERNEL_OK")
</pallas_src>

<mosaic_0001>
module attributes {stable_mosaic.version = 11 : i64} {
  func.func @_mlp_kernel(%arg0: i32, %arg1: memref<4x128xf32, #tpu.memory_space<vmem>>, %arg2: memref<16x4xf32, #tpu.memory_space<vmem>>, %arg3: memref<16x1xf32, #tpu.memory_space<vmem>>, %arg4: memref<8x16xf32, #tpu.memory_space<vmem>>, %arg5: memref<8x1xf32, #tpu.memory_space<vmem>>, %arg6: memref<8x1xf32, #tpu.memory_space<vmem>>, %arg7: memref<1x1xf32, #tpu.memory_space<vmem>>, %arg8: memref<1x128xf32, #tpu.memory_space<vmem>>) attributes {dimension_semantics = [#tpu.dimension_semantics<parallel>], iteration_bounds = array<i64: 1>, scalar_prefetch = 0 : i64, scratch_operands = 0 : i64, tpu.core_type = #tpu.core_type<tc>, window_params = [{transform_indices = @transform_0, window_bounds = array<i64: 4, 128>}, {pipeline_mode = #tpu.pipeline_mode<synchronous>, transform_indices = @transform_1, window_bounds = array<i64: 16, 4>}, {pipeline_mode = #tpu.pipeline_mode<synchronous>, transform_indices = @transform_2, window_bounds = array<i64: 16, 1>}, {pipeline_mode = #tpu.pipeline_mode<synchronous>, transform_indices = @transform_3, window_bounds = array<i64: 8, 16>}, {pipeline_mode = #tpu.pipeline_mode<synchronous>, transform_indices = @transform_4, window_bounds = array<i64: 8, 1>}, {pipeline_mode = #tpu.pipeline_mode<synchronous>, transform_indices = @transform_5, window_bounds = array<i64: 8, 1>}, {pipeline_mode = #tpu.pipeline_mode<synchronous>, transform_indices = @transform_6, window_bounds = array<i64: 1, 1>}, {transform_indices = @transform_7, window_bounds = array<i64: 1, 128>}]} {
    %c0 = arith.constant 0 : index
    %c0_0 = arith.constant 0 : index
    %0 = vector.load %arg1[%c0, %c0_0] : memref<4x128xf32, #tpu.memory_space<vmem>>, vector<4x128xf32>
    %c0_1 = arith.constant 0 : index
    %c0_2 = arith.constant 0 : index
    %1 = vector.load %arg2[%c0_1, %c0_2] : memref<16x4xf32, #tpu.memory_space<vmem>>, vector<16x4xf32>
    %c0_3 = arith.constant 0 : index
    %c0_4 = arith.constant 0 : index
    %2 = vector.load %arg3[%c0_3, %c0_4] : memref<16x1xf32, #tpu.memory_space<vmem>>, vector<16x1xf32>
    %3 = vector.extract_strided_slice %1 {offsets = [0, 0], sizes = [16, 1], strides = [1, 1]} : vector<16x4xf32> to vector<16x1xf32>
    %4 = vector.extract_strided_slice %0 {offsets = [0, 0], sizes = [1, 128], strides = [1, 1]} : vector<4x128xf32> to vector<1x128xf32>
    %5 = vector.broadcast %3 : vector<16x1xf32> to vector<16x128xf32>
    %6 = vector.broadcast %4 : vector<1x128xf32> to vector<16x128xf32>
    %7 = arith.mulf %5, %6 : vector<16x128xf32>
    %8 = vector.broadcast %2 : vector<16x1xf32> to vector<16x128xf32>
    %9 = arith.addf %8, %7 : vector<16x128xf32>
    %10 = vector.extract_strided_slice %1 {offsets = [0, 1], sizes = [16, 1], strides = [1, 1]} : vector<16x4xf32> to vector<16x1xf32>
    %11 = vector.extract_strided_slice %0 {offsets = [1, 0], sizes = [1, 128], strides = [1, 1]} : vector<4x128xf32> to vector<1x128xf32>
    %12 = vector.broadcast %10 : vector<16x1xf32> to vector<16x128xf32>
    %13 = vector.broadcast %11 : vector<1x128xf32> to vector<16x128xf32>
    %14 = arith.mulf %12, %13 : vector<16x128xf32>
    %15 = arith.addf %9, %14 : vector<16x128xf32>
    %16 = vector.extract_strided_slice %1 {offsets = [0, 2], sizes = [16, 1], strides = [1, 1]} : vector<16x4xf32> to vector<16x1xf32>
    %17 = vector.extract_strided_slice %0 {offsets = [2, 0], sizes = [1, 128], strides = [1, 1]} : vector<4x128xf32> to vector<1x128xf32>
    %18 = vector.broadcast %16 : vector<16x1xf32> to vector<16x128xf32>
    %19 = vector.broadcast %17 : vector<1x128xf32> to vector<16x128xf32>
    %20 = arith.mulf %18, %19 : vector<16x128xf32>
    %21 = arith.addf %15, %20 : vector<16x128xf32>
    %22 = vector.extract_strided_slice %1 {offsets = [0, 3], sizes = [16, 1], strides = [1, 1]} : vector<16x4xf32> to vector<16x1xf32>
    %23 = vector.extract_strided_slice %0 {offsets = [3, 0], sizes = [1, 128], strides = [1, 1]} : vector<4x128xf32> to vector<1x128xf32>
    %24 = vector.broadcast %22 : vector<16x1xf32> to vector<16x128xf32>
    %25 = vector.broadcast %23 : vector<1x128xf32> to vector<16x128xf32>
    %26 = arith.mulf %24, %25 : vector<16x128xf32>
    %27 = arith.addf %21, %26 : vector<16x128xf32>
    %cst = arith.constant 0.000000e+00 : f32
    %28 = vector.broadcast %cst : f32 to vector<16x128xf32>
    %29 = arith.maximumf %27, %28 : vector<16x128xf32>
    %c0_5 = arith.constant 0 : index
    %c0_6 = arith.constant 0 : index
    %30 = vector.load %arg4[%c0_5, %c0_6] : memref<8x16xf32, #tpu.memory_space<vmem>>, vector<8x16xf32>
    %cst_7 = arith.constant dense<0.000000e+00> : vector<8x128xf32>
    %31 = tpu.matmul %30, %29, %cst_7 {dimension_numbers = #tpu.dot_dimension_numbers<[1], [0], [0], [1], [0, 0, 1, 1], [], []>} : vector<8x16xf32>, vector<16x128xf32>, vector<8x128xf32> -> vector<8x128xf32>
    %c0_8 = arith.constant 0 : index
    %c0_9 = arith.constant 0 : index
    %32 = vector.load %arg5[%c0_8, %c0_9] : memref<8x1xf32, #tpu.memory_space<vmem>>, vector<8x1xf32>
    %33 = vector.broadcast %32 : vector<8x1xf32> to vector<8x128xf32>
    %34 = arith.addf %31, %33 : vector<8x128xf32>
    %cst_10 = arith.constant 0.000000e+00 : f32
    %35 = vector.broadcast %cst_10 : f32 to vector<8x128xf32>
    %36 = arith.maximumf %34, %35 : vector<8x128xf32>
    %c0_11 = arith.constant 0 : index
    %c0_12 = arith.constant 0 : index
    %37 = vector.load %arg6[%c0_11, %c0_12] : memref<8x1xf32, #tpu.memory_space<vmem>>, vector<8x1xf32>
    %38 = vector.broadcast %37 : vector<8x1xf32> to vector<8x128xf32>
    %39 = arith.mulf %38, %36 : vector<8x128xf32>
    %cst_13 = arith.constant dense<0.000000e+00> : vector<128xf32>
    %40 = vector.multi_reduction <add>, %39, %cst_13 [0] : vector<8x128xf32> to vector<128xf32>
    %41 = vector.shape_cast %40 : vector<128xf32> to vector<1x128xf32>
    %c0_14 = arith.constant 0 : index
    %c0_15 = arith.constant 0 : index
    %42 = vector.load %arg7[%c0_14, %c0_15] : memref<1x1xf32, #tpu.memory_space<vmem>>, vector<1x1xf32>
    %43 = vector.broadcast %42 : vector<1x1xf32> to vector<1x128xf32>
    %44 = arith.addf %41, %43 : vector<1x128xf32>
    %45 = arith.negf %44 : vector<1x128xf32>
    %46 = math.exp %45 : vector<1x128xf32>
    %cst_16 = arith.constant 1.000000e+00 : f32
    %47 = vector.broadcast %cst_16 : f32 to vector<1x128xf32>
    %48 = arith.addf %47, %46 : vector<1x128xf32>
    %49 = arith.divf %47, %48 : vector<1x128xf32>
    %c0_17 = arith.constant 0 : index
    %c0_18 = arith.constant 0 : index
    %50 = vector.load %arg8[%c0_17, %c0_18] : memref<1x128xf32, #tpu.memory_space<vmem>>, vector<1x128xf32>
    tpu.vector_store %arg8[%c0_17, %c0_18], %49 {strides = array<i32>} : memref<1x128xf32, #tpu.memory_space<vmem>>, vector<1x128xf32>,
    return
  }
  func.func @transform_0(%arg0: i32) -> (i32, i32) {
    %c0_i32 = arith.constant 0 : i32
    %c0_i32_0 = arith.constant 0 : i32
    return %c0_i32, %arg0 : i32, i32
  }
  func.func @transform_1(%arg0: i32) -> (i32, i32) {
    %c0_i32 = arith.constant 0 : i32
    %c0_i32_0 = arith.constant 0 : i32
    %c0_i32_1 = arith.constant 0 : i32
    return %c0_i32, %c0_i32_0 : i32, i32
  }
  func.func @transform_2(%arg0: i32) -> (i32, i32) {
    %c0_i32 = arith.constant 0 : i32
    %c0_i32_0 = arith.constant 0 : i32
    %c0_i32_1 = arith.constant 0 : i32
    return %c0_i32, %c0_i32_0 : i32, i32
  }
  func.func @transform_3(%arg0: i32) -> (i32, i32) {
    %c0_i32 = arith.constant 0 : i32
    %c0_i32_0 = arith.constant 0 : i32
    %c0_i32_1 = arith.constant 0 : i32
    return %c0_i32, %c0_i32_0 : i32, i32
  }
  func.func @transform_4(%arg0: i32) -> (i32, i32) {
    %c0_i32 = arith.constant 0 : i32
    %c0_i32_0 = arith.constant 0 : i32
    %c0_i32_1 = arith.constant 0 : i32
    return %c0_i32, %c0_i32_0 : i32, i32
  }
  func.func @transform_5(%arg0: i32) -> (i32, i32) {
    %c0_i32 = arith.constant 0 : i32
    %c0_i32_0 = arith.constant 0 : i32
    %c0_i32_1 = arith.constant 0 : i32
    return %c0_i32, %c0_i32_0 : i32, i32
  }
  func.func @transform_6(%arg0: i32) -> (i32, i32) {
    %c0_i32 = arith.constant 0 : i32
    %c0_i32_0 = arith.constant 0 : i32
    %c0_i32_1 = arith.constant 0 : i32
    return %c0_i32, %c0_i32_0 : i32, i32
  }
  func.func @transform_7(%arg0: i32) -> (i32, i32) {
    %c0_i32 = arith.constant 0 : i32
    %c0_i32_0 = arith.constant 0 : i32
    return %c0_i32, %arg0 : i32, i32
  }
}

</mosaic_0001>

<llo_original>
// kernel: tpu_custom_call.1
$region0: #{tpu_custom_call.1}
  #allocation0 [shape = 'u32[]', space=smem, size = 0x4, offset = 0x4, fixed_abs, tag = 'smem constant byte address 0x4 - core index']
  #allocation1 [shape = 'u32[72,128]{1,0:T(1,128)}', space=vmem, size = 0x9000, scoped, tag = 'internal scratch']
  #allocation2 [shape = 'f32[1,1]{1,0:T(1,128)S(1)}', space=vmem, size = 0x200, scoped, tag = 'scoped memory for tpu_custom_call.1']
  %s0 = inlined_call_operand.vmem [shape: f32[4,128], index: 0, kind: input, shape index: {}]
  %s1 = inlined_call_operand.vmem [shape: f32[16,4], index: 1, kind: input, shape index: {}]
  %s2 = inlined_call_operand.vmem [shape: f32[16,1], index: 2, kind: input, shape index: {}]
  %s3 = inlined_call_operand.vmem [shape: f32[8,16], index: 3, kind: input, shape index: {}]
  %s4 = inlined_call_operand.vmem [shape: f32[8,1], index: 4, kind: input, shape index: {}]
  %s5 = inlined_call_operand.vmem [shape: f32[8,1], index: 5, kind: input, shape index: {}]
  %s6 = inlined_call_operand.<no memory space> [shape: f32[1,1], index: 6, kind: input, shape index: {}]
  %s7 = inlined_call_operand.hbm [shape: f32[1,128], index: 7, kind: output, shape index: {}]
  %s8 = sld [smem:[#allocation0]]
  $region38: #{tpu_custom_call.1} parent=0
    _
  %s10 = ssub.s32 1, %s8
  %s11 = scalar_select 0, %s10, %s8
  %v12 = vstv %s6
  %13 = vst [vmem:[#allocation2] sm:$0x1] %v12
  $region1: #{tpu_custom_call.1} parent=0
    #allocation3 [shape = 'u8[512]{0}', space=vmem, size = 0x400, scoped, tag = 'output window, operand 0, single buffered']
    #allocation4 [shape = 's32[1]{0}', space=sflag, size = 0x4, scoped, tag = 'scoped memory for tpu_custom_call.1']
    %14 = vsyncpa [#allocation4], 0
    // Predicated region
    $region2: #{tpu_custom_call.1} parent=1 // pred_check
      _
    $region3: #{tpu_custom_call.1} parent=1 // pred_check_branch
      %16 = sbr.rel (0) target = $region5
    $region4: #{tpu_custom_call.1} parent=1 // pred_region
      _
    $region5: #{tpu_custom_call.1} parent=1 // pred_fallthru
      _
    // Predicated region
    $region6: #{tpu_custom_call.1} parent=1 // pred_check
      _
    $region7: #{tpu_custom_call.1} parent=1 // pred_check_branch
      %18 = sbr.rel (0) target = $region9
    $region8: #{tpu_custom_call.1} parent=1 // pred_region
      _
    $region9: #{tpu_custom_call.1} parent=1 // pred_fallthru
      _
    // Predicated region
    $region10: #{tpu_custom_call.1} parent=1 // pred_check
      _
    $region11: #{tpu_custom_call.1} parent=1 // pred_check_branch
      %20 = sbr.rel (0) target = $region13
    $region12: #{tpu_custom_call.1} parent=1 // pred_region
      _
    $region13: #{tpu_custom_call.1} parent=1 // pred_fallthru
      _
    // Predicated region
    $region14: #{tpu_custom_call.1} parent=1 // pred_check
      _
    $region15: #{tpu_custom_call.1} parent=1 // pred_check_branch
      %22 = sbr.rel (0) target = $region17
    $region16: #{tpu_custom_call.1} parent=1 // pred_region
      _
    $region17: #{tpu_custom_call.1} parent=1 // pred_fallthru
      _
    // Predicated region
    $region18: #{tpu_custom_call.1} parent=1 // pred_check
      _
    $region19: #{tpu_custom_call.1} parent=1 // pred_check_branch
      %24 = sbr.rel (0) target = $region21
    $region20: #{tpu_custom_call.1} parent=1 // pred_region
      _
    $region21: #{tpu_custom_call.1} parent=1 // pred_fallthru
      _
    // Predicated region
    $region22: #{tpu_custom_call.1} parent=1 // pred_check
      _
    $region23: #{tpu_custom_call.1} parent=1 // pred_check_branch
      %26 = sbr.rel (0) target = $region25
    $region24: #{tpu_custom_call.1} parent=1 // pred_region
      _
    $region25: #{tpu_custom_call.1} parent=1 // pred_fallthru
      _
    // Predicated region
    $region26: #{tpu_custom_call.1} parent=1 // pred_check
      _
    $region27: #{tpu_custom_call.1} parent=1 // pred_check_branch
      %28 = sbr.rel (0) target = $region29
    $region28: #{tpu_custom_call.1} parent=1 // pred_region
      _
    $region29: #{tpu_custom_call.1} parent=1 // pred_fallthru
      _
    %v29 = vld [vmem:[%s0] sm:$0xf]
    %v30 = vld [vmem:[%s1] sm:$0xff]
    %v31 = vld [vmem:[%s1 + $0x8] sm:$0xff]
    %v32 = vld [vmem:[%s2] sm:$0xff]
    %v33 = vld [vmem:[%s2 + $0x8] sm:$0xff]
    %35 = vset.pattern.permute.xlu0 0
    %36 = vperm.xlu0 %35, %v30
    %v37 = vpop.permute.xlu0 %36
    %40 = vset.pattern.permute.xlu0 0
    %41 = vperm.xlu0 %40, %v31
    %v42 = vpop.permute.xlu0 %41
    %v44 = vperm.slane %v29, 0
    %v45 = vmul.f32 %v37, %v44
    %v46 = vmul.f32 %v42, %v44
    %48 = vset.pattern.permute.xlu0 0
    %49 = vperm.xlu0 %48, %v32
    %v50 = vpop.permute.xlu0 %49
    %53 = vset.pattern.permute.xlu0 0
    %54 = vperm.xlu0 %53, %v33
    %v55 = vpop.permute.xlu0 %54
    %v57 = vadd.f32 %v50, %v45
    %v58 = vadd.f32 %v55, %v46
    %59 = vset.pattern.permute.xlu0 1
    %60 = vperm.xlu0 %59, %v30
    %v61 = vpop.permute.xlu0 %60
    %63 = vset.pattern.permute.xlu0 1
    %64 = vperm.xlu0 %63, %v31
    %v65 = vpop.permute.xlu0 %64
    %v67 = vperm.slane %v29, 1
    %v68 = vmul.f32 %v61, %v67
    %v69 = vmul.f32 %v65, %v67
    %v70 = vadd.f32 %v57, %v68
    %v71 = vadd.f32 %v58, %v69
    %72 = vset.pattern.permute.xlu0 2
    %73 = vperm.xlu0 %72, %v30
    %v74 = vpop.permute.xlu0 %73
    %76 = vset.pattern.permute.xlu0 2
    %77 = vperm.xlu0 %76, %v31
    %v78 = vpop.permute.xlu0 %77
    %v80 = vperm.slane %v29, 2
    %v81 = vmul.f32 %v74, %v80
    %v82 = vmul.f32 %v78, %v80
    %v83 = vadd.f32 %v70, %v81
    %v84 = vadd.f32 %v71, %v82
    %85 = vset.pattern.permute.xlu0 3
    %86 = vperm.xlu0 %85, %v30
    %v87 = vpop.permute.xlu0 %86
    %89 = vset.pattern.permute.xlu0 3
    %90 = vperm.xlu0 %89, %v31
    %v91 = vpop.permute.xlu0 %90
    %v93 = vperm.slane %v29, 3
    %v94 = vmul.f32 %v87, %v93
    %v95 = vmul.f32 %v91, %v93
    %v96 = vadd.f32 %v83, %v94
    %v97 = vadd.f32 %v84, %v95
    %v98 = vmax.f32 %v96, 0.0
    %v99 = vmax.f32 %v97, 0.0
    %v100 = vld [vmem:[%s3] sm:$0xff]
    %v101 = vld [vmem:[%s4] sm:$0xff]
    %103 = vset.pattern.permute.xlu0 0
    %104 = vperm.xlu0 %103, %v101
    %v105 = vpop.permute.xlu0 %104
    %vm107 = vcmask 130048
    %v109 = vsel %vm107, %v100, 0
    %111 = vmatpush.msra.mxu0 0.0
    %112 = vmatpush.msra.mxu0 0.0
    %113 = vmatpush.msra.mxu0 0.0
    %114 = vmatpush.msra.mxu0 0.0
    %115 = vmatpush.msra.mxu0 0.0
    %116 = vmatpush.msra.mxu0 0.0
    %117 = vmatpush.msra.mxu0 0.0
    %118 = vmatpush.msra.mxu0 0.0
    %119 = vmatpush.msra.mxu0 0.0
    %120 = vmatpush.msra.mxu0 0.0
    %121 = vmatpush.msra.mxu0 0.0
    %122 = vmatpush.msra.mxu0 0.0
    %123 = vmatpush.msra.mxu0 0.0
    %124 = vmatpush.msra.mxu0 0.0
    %125 = vmatpush.msra.mxu0 %v99
    %126 = vmatpush.msra.mxu0 %v98
    %127 = vmatmul.f32.gmra.mxu0 %v109
    %v128 = vpop.f32.mrf.mxu0
    %v129 = vadd.f32 %v105, %v128
    %130 = vdwg.mxu0
    %v131 = vmax.f32 %v129, 0.0
    %v132 = vld [vmem:[%s5] sm:$0xff]
    %134 = vset.pattern.permute.xlu0 0
    %135 = vperm.xlu0 %134, %v132
    %v136 = vpop.permute.xlu0 %135
    %v138 = vmul.f32 %v136, %v131
    %v139 = vrot.slane %v138, 4
    %v140 = vadd.f32 %v138, %v139
    %v141 = vrot.slane %v140, 2
    %v142 = vadd.f32 %v140, %v141
    %v143 = vrot.slane %v142, 1
    %v144 = vadd.f32 %v142, %v143
    %v145 = vld [vmem:[#allocation2] sm:$0x1]
    %147 = vset.pattern.permute.xlu0 0
    %148 = vperm.xlu0 %147, %v145
    %v149 = vpop.permute.xlu0 %148
    %v151 = vperm.slane %v149, 0
    %v152 = vadd.f32 %v144, %v151
    %v153 = vxor.u32 %v152, 2147483648
    %v154 = vmul.f32 %v153, 1.442695
    %v155 = vpow.pop %v154
    %v156 = vadd.f32 %v155, 1.0
    %v157 = vrcp.pop %v156
    %v158 = vmul.f32 %v156, %v157
    %v159 = vsub.f32 1.0, %v158
    %v160 = vmul.f32 %v157, %v159
    %v161 = vadd.f32 %v157, %v160
    %vm162 = vweird.f32 %v156
    %vm163 = vweird.f32 %v157
    %vm164 = vmor %vm162, %vm163
    %v165 = vsel %vm164, %v157, %v161
    %v166 = vand.u32 2147483647, %v156
    %vm167 = vcmp.eq.f32.partialorder %v166, 8.507059e+37
    %v168 = vand.u32 %v156, 2147483648
    %v169 = vor.u32 1.1754944e-38, %v168
    %v170 = vsel %vm167, %v169, %v165
    %v171 = vmul.f32 1.0, %v170
    %172 = vst [vmem:[#allocation3] sm:$0x1] %v171
    // Predicated region
    $region30: #{tpu_custom_call.1} parent=1 // pred_check
      _
    $region31: #{tpu_custom_call.1} parent=1 // pred_check_branch
      %174 = sbr.rel (0) target = $region33
    $region32: #{tpu_custom_call.1} parent=1 // pred_region
      %176 = vsyncadd [#allocation4], 0
      %s178 = sshll.u32 [#allocation3], 4
      %s179 = int_to_ptr.vmem [resolvable:$true] %s178
      %s180 = sshll.u32 %s7, 4
      %s181 = int_to_ptr.hbm [resolvable:$true] %s180
      %183 = dma.vmem_to_hbm [thread:$0]  %s179, 16, %s181, [#allocation4]
    $region33: #{tpu_custom_call.1} parent=1 // pred_fallthru
      _
    // Predicated region
    $region34: #{tpu_custom_call.1} parent=1 // pred_check
      _
    $region35: #{tpu_custom_call.1} parent=1 // pred_check_branch
      %185 = sbr.rel (0) target = $region37
    $region36: #{tpu_custom_call.1} parent=1 // pred_region
      %187 = dma.done [#allocation4], 16
    $region37: #{tpu_custom_call.1} parent=1 // pred_fallthru
      _
    %188 = vsyncpa [#allocation4], 1

</llo_original>
